<compile_context>
chip_gen: v5e
topology: v5e:2x2
jax: 0.10.0
libtpu: 0.0.40
codegen_flags: <defaults>
</compile_context>

<pallas_src>
import functools
import math

import jax
import jax.numpy as jnp
from jax.experimental import pallas as pl
from jax.experimental.pallas import tpu as pltpu


def _gelu_tanh(x):
    # tanh-approx GELU: pushes the transcendental onto the EUP slot.
    c = math.sqrt(2.0 / math.pi)
    return 0.5 * x * (1.0 + jnp.tanh(c * (x + 0.044715 * (x * x * x))))


# ----------------------------- Pallas kernel ------------------------------ #

def _fused_nm_matmul_kernel(w_ref, x_ref, b_ref, o_ref, *, apply_gelu):
    # w_ref: (N, K) bf16   x_ref: (K, tm) bf16   b_ref: (N, 1) f32   o_ref: (N, tm)
    y = jnp.dot(w_ref[...], x_ref[...], preferred_element_type=jnp.float32)
    y = y + b_ref[...]            # conv-bias + BN shift (BN scale folded into w)
    if apply_gelu:
        y = _gelu_tanh(y)
    o_ref[...] = y.astype(o_ref.dtype)


def fused_nm_matmul(w, x, bias, *, apply_gelu, out_dtype, tm_target):
    """w: (N, K) bf16, x: (B, K, M) bf16, bias: (N, 1) f32 -> (B, N, M)."""
    N, K = w.shape
    B, _, M = x.shape
    tm = tm_target if M >= tm_target else M      # lane tile; == full M when small
    grid = (B, pl.cdiv(M, tm))
    return pl.pallas_call(
        functools.partial(_fused_nm_matmul_kernel, apply_gelu=apply_gelu),
        out_shape=jax.ShapeDtypeStruct((B, N, M), out_dtype),
        grid_spec=pltpu.PrefetchScalarGridSpec(
            num_scalar_prefetch=0,
            grid=grid,
            in_specs=[
                pl.BlockSpec((N, K), lambda b, m: (0, 0)),         # weights (whole)
                pl.BlockSpec((None, K, tm), lambda b, m: (b, 0, m)),  # patches tile
                pl.BlockSpec((N, 1), lambda b, m: (0, 0)),         # folded bias
            ],
            out_specs=pl.BlockSpec((None, N, tm), lambda b, m: (b, 0, m)),
        ),
        compiler_params=pltpu.CompilerParams(
            dimension_semantics=("parallel", "parallel")),
    )(w, x, bias)


# ------------------------------ JAX glue ---------------------------------- #

def _im2col_3d(x, stride):
    """x: (B, C, T, H, W), k=3, pad=1 -> (B, C*27, To*Ho*Wo); K order = (c, kt, kh, kw)."""
    B, C, T, H, W = x.shape
    st, sh, sw = stride
    xp = jnp.pad(x, ((0, 0), (0, 0), (1, 1), (1, 1), (1, 1)))
    To = (T + 2 - 3) // st + 1
    Ho = (H + 2 - 3) // sh + 1
    Wo = (W + 2 - 3) // sw + 1
    cols = []
    for kt in range(3):
        for kh in range(3):
            for kw in range(3):
                cols.append(xp[:, :,
                               kt: kt + st * To: st,
                               kh: kh + sh * Ho: sh,
                               kw: kw + sw * Wo: sw])
    patches = jnp.stack(cols, axis=2)                  # (B, C, 27, To, Ho, Wo)
    return patches.reshape(B, C * 27, To * Ho * Wo), (To, Ho, Wo)


def conv3d_bn(x, w, conv_bias, bn_gamma, bn_beta, bn_mean, bn_var,
              *, stride, apply_gelu, out_dtype, tm_target, eps=1e-5):
    """Conv3d(k=3, pad=1, stride) + bias + BatchNorm3d(eval) [+ GELU], NCDHW in/out."""
    N = w.shape[0]
    B = x.shape[0]
    patches, (To, Ho, Wo) = _im2col_3d(x.astype(jnp.bfloat16), stride)
    scale = bn_gamma / jnp.sqrt(bn_var + eps)
    w_fold = (w.reshape(N, -1) * scale[:, None]).astype(jnp.bfloat16)      # (N, C*27)
    b_fold = ((conv_bias - bn_mean) * scale + bn_beta).astype(jnp.float32).reshape(N, 1)
    y = fused_nm_matmul(w_fold, patches, b_fold, apply_gelu=apply_gelu,
                        out_dtype=out_dtype, tm_target=tm_target)          # (B, N, M)
    return y.reshape(B, N, To, Ho, Wo)


def special_patch_embed_forward(x, p):
    y = conv3d_bn(x, p["w1"], p["b1"], p["g1"], p["beta1"], p["m1"], p["v1"],
                  stride=(1, 2, 2), apply_gelu=True,
                  out_dtype=jnp.bfloat16, tm_target=256)
    y = conv3d_bn(y, p["w2"], p["b2"], p["g2"], p["beta2"], p["m2"], p["v2"],
                  stride=(2, 2, 2), apply_gelu=False,
                  out_dtype=jnp.float32, tm_target=512)
    # x.flatten(2).transpose(1,2).reshape(B,T,H,W,-1).permute(0,4,1,2,3) == identity
    return y


# ------------------------- pure-JAX reference ------------------------------ #

def _ref_conv_bn(x, w, b, g, beta, m, v, stride, apply_gelu, eps=1e-5):
    y = jax.lax.conv_general_dilated(
        x, w, window_strides=stride, padding=[(1, 1)] * 3,
        dimension_numbers=("NCDHW", "OIDHW", "NCDHW"),
        precision=jax.lax.Precision.HIGHEST)
    y = y + b[None, :, None, None, None]
    scale = (g / jnp.sqrt(v + eps))[None, :, None, None, None]
    y = (y - m[None, :, None, None, None]) * scale + beta[None, :, None, None, None]
    if apply_gelu:
        y = jax.nn.gelu(y, approximate=False)
    return y


def _ref_forward(x, p):
    y = _ref_conv_bn(x, p["w1"], p["b1"], p["g1"], p["beta1"], p["m1"], p["v1"],
                     (1, 2, 2), True)
    y = _ref_conv_bn(y, p["w2"], p["b2"], p["g2"], p["beta2"], p["m2"], p["v2"],
                     (2, 2, 2), False)
    return y


# --------------------------------- main ------------------------------------ #

def _init_params(key, in_chans, embed_dim):
    mid = embed_dim // 2
    ks = jax.random.split(key, 12)
    f1 = in_chans * 27
    f2 = mid * 27
    return {
        "w1": jax.random.normal(ks[0], (mid, in_chans, 3, 3, 3), jnp.float32) / math.sqrt(f1),
        "b1": 0.1 * jax.random.normal(ks[1], (mid,), jnp.float32),
        "g1": 1.0 + 0.1 * jax.random.normal(ks[2], (mid,), jnp.float32),
        "beta1": 0.1 * jax.random.normal(ks[3], (mid,), jnp.float32),
        "m1": 0.1 * jax.random.normal(ks[4], (mid,), jnp.float32),
        "v1": 1.0 + 0.1 * jnp.abs(jax.random.normal(ks[5], (mid,), jnp.float32)),
        "w2": jax.random.normal(ks[6], (embed_dim, mid, 3, 3, 3), jnp.float32) / math.sqrt(f2),
        "b2": 0.1 * jax.random.normal(ks[7], (embed_dim,), jnp.float32),
        "g2": 1.0 + 0.1 * jax.random.normal(ks[8], (embed_dim,), jnp.float32),
        "beta2": 0.1 * jax.random.normal(ks[9], (embed_dim,), jnp.float32),
        "m2": 0.1 * jax.random.normal(ks[10], (embed_dim,), jnp.float32),
        "v2": 1.0 + 0.1 * jnp.abs(jax.random.normal(ks[11], (embed_dim,), jnp.float32)),
    }


if __name__ == "__main__":
    B, in_chans, T, H, W = 2, 3, 4, 16, 16
    embed_dim = 32

    key = jax.random.PRNGKey(0)
    kx, kp = jax.random.split(key)
    x = jax.random.normal(kx, (B, in_chans, T, H, W), jnp.float32)
    params = _init_params(kp, in_chans, embed_dim)

    out = jax.jit(special_patch_embed_forward)(x, params)
    out = jax.block_until_ready(out)

    expected_shape = (B, embed_dim, T // 2, H // 4, W // 4)
    assert out.shape == expected_shape, (out.shape, expected_shape)
    assert out.dtype == jnp.float32
    assert bool(jnp.all(jnp.isfinite(out)))

    ref = jax.block_until_ready(_ref_forward(x, params))
    # Tolerance accounts for bf16 MXU inputs (f32 accumulation) + tanh-GELU approx.
    max_err = float(jnp.max(jnp.abs(out - ref)))
    assert jnp.allclose(out, ref, rtol=5e-2, atol=5e-2), max_err

    print("KERNEL_OK")
</pallas_src>

<mosaic_0001>
module attributes {stable_mosaic.version = 11 : i64} {
  func.func @_fused_nm_matmul_kernel(%arg0: i32, %arg1: i32, %arg2: memref<16x81xbf16, #tpu.memory_space<vmem>>, %arg3: memref<1x81x256xbf16, #tpu.memory_space<vmem>>, %arg4: memref<16x1xf32, #tpu.memory_space<vmem>>, %arg5: memref<1x16x256xbf16, #tpu.memory_space<vmem>>) attributes {dimension_semantics = [#tpu.dimension_semantics<parallel>, #tpu.dimension_semantics<parallel>], iteration_bounds = array<i64: 2, 1>, scalar_prefetch = 0 : i64, scratch_operands = 0 : i64, tpu.core_type = #tpu.core_type<tc>, window_params = [{pipeline_mode = #tpu.pipeline_mode<synchronous>, transform_indices = @transform_0, window_bounds = array<i64: 16, 81>}, {transform_indices = @transform_1, window_bounds = array<i64: 1, 81, 256>}, {pipeline_mode = #tpu.pipeline_mode<synchronous>, transform_indices = @transform_2, window_bounds = array<i64: 16, 1>}, {transform_indices = @transform_3, window_bounds = array<i64: 1, 16, 256>}]} {
    %c0 = arith.constant 0 : index
    %c0_0 = arith.constant 0 : index
    %0 = vector.load %arg2[%c0, %c0_0] : memref<16x81xbf16, #tpu.memory_space<vmem>>, vector<16x81xbf16>
    %c0_1 = arith.constant 0 : index
    %c0_2 = arith.constant 0 : index
    %c0_3 = arith.constant 0 : index
    %1 = vector.load %arg3[%c0_1, %c0_2, %c0_3] : memref<1x81x256xbf16, #tpu.memory_space<vmem>>, vector<1x81x256xbf16>
    %2 = vector.shape_cast %1 : vector<1x81x256xbf16> to vector<81x256xbf16>
    %cst = arith.constant dense<0.000000e+00> : vector<16x256xf32>
    %3 = tpu.matmul %0, %2, %cst {dimension_numbers = #tpu.dot_dimension_numbers<[1], [0], [0], [1], [0, 0, 1, 1], [], []>} : vector<16x81xbf16>, vector<81x256xbf16>, vector<16x256xf32> -> vector<16x256xf32>
    %c0_4 = arith.constant 0 : index
    %c0_5 = arith.constant 0 : index
    %4 = vector.load %arg4[%c0_4, %c0_5] : memref<16x1xf32, #tpu.memory_space<vmem>>, vector<16x1xf32>
    %5 = vector.broadcast %4 : vector<16x1xf32> to vector<16x256xf32>
    %6 = arith.addf %3, %5 : vector<16x256xf32>
    %cst_6 = arith.constant 5.000000e-01 : f32
    %7 = vector.broadcast %cst_6 : f32 to vector<16x256xf32>
    %8 = arith.mulf %7, %6 : vector<16x256xf32>
    %9 = arith.mulf %6, %6 : vector<16x256xf32>
    %10 = arith.mulf %9, %6 : vector<16x256xf32>
    %cst_7 = arith.constant 4.471500e-02 : f32
    %11 = vector.broadcast %cst_7 : f32 to vector<16x256xf32>
    %12 = arith.mulf %11, %10 : vector<16x256xf32>
    %13 = arith.addf %6, %12 : vector<16x256xf32>
    %cst_8 = arith.constant 0.797884583 : f32
    %14 = vector.broadcast %cst_8 : f32 to vector<16x256xf32>
    %15 = arith.mulf %14, %13 : vector<16x256xf32>
    %16 = math.tanh %15 : vector<16x256xf32>
    %cst_9 = arith.constant 1.000000e+00 : f32
    %17 = vector.broadcast %cst_9 : f32 to vector<16x256xf32>
    %18 = arith.addf %17, %16 : vector<16x256xf32>
    %19 = arith.mulf %8, %18 : vector<16x256xf32>
    %20 = arith.truncf %19 : vector<16x256xf32> to vector<16x256xbf16>
    %c0_10 = arith.constant 0 : index
    %c0_11 = arith.constant 0 : index
    %c0_12 = arith.constant 0 : index
    %21 = vector.load %arg5[%c0_10, %c0_11, %c0_12] : memref<1x16x256xbf16, #tpu.memory_space<vmem>>, vector<1x16x256xbf16>
    %22 = vector.shape_cast %21 : vector<1x16x256xbf16> to vector<16x256xbf16>
    %23 = vector.shape_cast %20 : vector<16x256xbf16> to vector<1x16x256xbf16>
    tpu.vector_store %arg5[%c0_10, %c0_11, %c0_12], %23 {strides = array<i32>} : memref<1x16x256xbf16, #tpu.memory_space<vmem>>, vector<1x16x256xbf16>,
    return
  }
  func.func @transform_0(%arg0: i32, %arg1: i32) -> (i32, i32) {
    %c0_i32 = arith.constant 0 : i32
    %c0_i32_0 = arith.constant 0 : i32
    %c0_i32_1 = arith.constant 0 : i32
    return %c0_i32, %c0_i32_0 : i32, i32
  }
  func.func @transform_1(%arg0: i32, %arg1: i32) -> (i32, i32, i32) {
    %c0_i32 = arith.constant 0 : i32
    %c0_i32_0 = arith.constant 0 : i32
    return %arg0, %c0_i32, %arg1 : i32, i32, i32
  }
  func.func @transform_2(%arg0: i32, %arg1: i32) -> (i32, i32) {
    %c0_i32 = arith.constant 0 : i32
    %c0_i32_0 = arith.constant 0 : i32
    %c0_i32_1 = arith.constant 0 : i32
    return %c0_i32, %c0_i32_0 : i32, i32
  }
  func.func @transform_3(%arg0: i32, %arg1: i32) -> (i32, i32, i32) {
    %c0_i32 = arith.constant 0 : i32
    %c0_i32_0 = arith.constant 0 : i32
    return %arg0, %c0_i32, %arg1 : i32, i32, i32
  }
}

module attributes {stable_mosaic.version = 11 : i64} {
  func.func @_fused_nm_matmul_kernel(%arg0: i32, %arg1: i32, %arg2: memref<32x432xbf16, #tpu.memory_space<vmem>>, %arg3: memref<1x432x32xbf16, #tpu.memory_space<vmem>>, %arg4: memref<32x1xf32, #tpu.memory_space<vmem>>, %arg5: memref<1x32x32xf32, #tpu.memory_space<vmem>>) attributes {dimension_semantics = [#tpu.dimension_semantics<parallel>, #tpu.dimension_semantics<parallel>], iteration_bounds = array<i64: 2, 1>, scalar_prefetch = 0 : i64, scratch_operands = 0 : i64, tpu.core_type = #tpu.core_type<tc>, window_params = [{pipeline_mode = #tpu.pipeline_mode<synchronous>, transform_indices = @transform_0, window_bounds = array<i64: 32, 432>}, {transform_indices = @transform_1, window_bounds = array<i64: 1, 432, 32>}, {pipeline_mode = #tpu.pipeline_mode<synchronous>, transform_indices = @transform_2, window_bounds = array<i64: 32, 1>}, {transform_indices = @transform_3, window_bounds = array<i64: 1, 32, 32>}]} {
    %c0 = arith.constant 0 : index
    %c0_0 = arith.constant 0 : index
    %0 = vector.load %arg2[%c0, %c0_0] : memref<32x432xbf16, #tpu.memory_space<vmem>>, vector<32x432xbf16>
    %c0_1 = arith.constant 0 : index
    %c0_2 = arith.constant 0 : index
    %c0_3 = arith.constant 0 : index
    %1 = vector.load %arg3[%c0_1, %c0_2, %c0_3] : memref<1x432x32xbf16, #tpu.memory_space<vmem>>, vector<1x432x32xbf16>
    %2 = vector.shape_cast %1 : vector<1x432x32xbf16> to vector<432x32xbf16>
    %cst = arith.constant dense<0.000000e+00> : vector<32x32xf32>
    %3 = tpu.matmul %0, %2, %cst {dimension_numbers = #tpu.dot_dimension_numbers<[1], [0], [0], [1], [0, 0, 1, 1], [], []>} : vector<32x432xbf16>, vector<432x32xbf16>, vector<32x32xf32> -> vector<32x32xf32>
    %c0_4 = arith.constant 0 : index
    %c0_5 = arith.constant 0 : index
    %4 = vector.load %arg4[%c0_4, %c0_5] : memref<32x1xf32, #tpu.memory_space<vmem>>, vector<32x1xf32>
    %5 = vector.broadcast %4 : vector<32x1xf32> to vector<32x32xf32>
    %6 = arith.addf %3, %5 : vector<32x32xf32>
    %c0_6 = arith.constant 0 : index
    %c0_7 = arith.constant 0 : index
    %c0_8 = arith.constant 0 : index
    %7 = vector.load %arg5[%c0_6, %c0_7, %c0_8] : memref<1x32x32xf32, #tpu.memory_space<vmem>>, vector<1x32x32xf32>
    %8 = vector.shape_cast %7 : vector<1x32x32xf32> to vector<32x32xf32>
    %9 = vector.shape_cast %6 : vector<32x32xf32> to vector<1x32x32xf32>
    tpu.vector_store %arg5[%c0_6, %c0_7, %c0_8], %9 {strides = array<i32>} : memref<1x32x32xf32, #tpu.memory_space<vmem>>, vector<1x32x32xf32>,
    return
  }
  func.func @transform_0(%arg0: i32, %arg1: i32) -> (i32, i32) {
    %c0_i32 = arith.constant 0 : i32
    %c0_i32_0 = arith.constant 0 : i32
    %c0_i32_1 = arith.constant 0 : i32
    return %c0_i32, %c0_i32_0 : i32, i32
  }
  func.func @transform_1(%arg0: i32, %arg1: i32) -> (i32, i32, i32) {
    %c0_i32 = arith.constant 0 : i32
    %c0_i32_0 = arith.constant 0 : i32
    return %arg0, %c0_i32, %arg1 : i32, i32, i32
  }
  func.func @transform_2(%arg0: i32, %arg1: i32) -> (i32, i32) {
    %c0_i32 = arith.constant 0 : i32
    %c0_i32_0 = arith.constant 0 : i32
    %c0_i32_1 = arith.constant 0 : i32
    return %c0_i32, %c0_i32_0 : i32, i32
  }
  func.func @transform_3(%arg0: i32, %arg1: i32) -> (i32, i32, i32) {
    %c0_i32 = arith.constant 0 : i32
    %c0_i32_0 = arith.constant 0 : i32
    return %arg0, %c0_i32, %arg1 : i32, i32, i32
  }
}

</mosaic_0001>

<llo_original>
// kernel: special_patch_embed_forward.2
$region0: #{special_patch_embed_forward.2}
  #allocation0 [shape = 'u32[]', space=smem, size = 0x4, offset = 0x4, fixed_abs, tag = 'smem constant byte address 0x4 - core index']
  #allocation1 [shape = 'u32[72,128]{1,0:T(1,128)}', space=vmem, size = 0x9000, scoped, tag = 'internal scratch']
  %s0 = inlined_call_operand.vmem [shape: bf16[16,81], index: 0, kind: input, shape index: {}]
  %s1 = inlined_call_operand.vmem [shape: bf16[2,81,256], index: 1, kind: input, shape index: {}]
  %s2 = inlined_call_operand.vmem [shape: f32[16,1], index: 2, kind: input, shape index: {}]
  %s3 = inlined_call_operand.vmem [shape: bf16[2,16,256], index: 3, kind: output, shape index: {}]
  %s4 = sld [smem:[#allocation0]]
  $region45: #{special_patch_embed_forward.2} parent=0
    _
  %s6 = ssub.s32 1, %s4
  %s7 = scalar_select 0, %s6, %s4
  loop: start=0, step=1, limit=4
  $region2: #{special_patch_embed_forward.2} parent=0 // loop_pre_header
    _
  $region3: #{special_patch_embed_forward.2} parent=0 // loop_header
    %s9 = sphi 0, %s13
    %p10 = scmp.ge.s32.totalorder %s9, 4
    %s16 = sphi 0, %s28
    %s17 = sphi 0, %s24
    %s18 = sphi 0, %s16
    %s19 = sphi 0, %s17
    %s20 = sphi 0, %s18
    %s21 = sphi 0, %s19
    %s29 = sphi 0, %s29
    %s31 = sphi 0, %s29
    %s32 = sphi 0, %s31
    %s46 = sphi 0, %s32
    %s54 = sphi 0, %s56
    %s57 = sphi 0, %s54
    %s58 = sphi 0, %s57
    %s74 = sphi 0, %s58
    %s78 = sphi 0, %s78
    %s80 = sphi 0, %s78
    %s81 = sphi 0, %s80
    %s95 = sphi 0, %s81
    %s103 = sphi 0, %s105
    %s106 = sphi 0, %s103
    %s107 = sphi 0, %s106
    %s123 = sphi 0, %s107
  $region4: #{special_patch_embed_forward.2} parent=0 // loop_header_branch
    %12 = sbr.rel (%p10) target = $region8
  $region5: #{special_patch_embed_forward.2} parent=0 // loop_body
    %s14 = ssub.s32 %s9, 1
    %s15 = ssub.s32 %s9, 2
    %s22 = sadd.s32 1, %s17
    %p23 = scmp.ge.s32.totalorder %s22, 1
    %s24 = scalar_select %p23, 0, %s22
    %s25 = sadd.s32 1, %s16
    %s26 = scalar_select %p23, %s25, %s16
    %p27 = scmp.ge.s32.totalorder %s26, 2
    %s28 = scalar_select %p27, 0, %s26
    %s30 = sadd.s32 %s29, 1
    %p33 = scmp.eq.s32.totalorder %s9, 1
    %p34 = scmp.ne.s32.totalorder %s29, %s31
    %p35 = scmp.eq.s32.totalorder %s9, 0
    %p36 = por %p34, %p35
    %p37 = scmp.ne.s32.totalorder %s29, %s31
    %p38 = scmp.eq.s32.totalorder %s14, 1
    %p39 = por %p37, %p38
    %p40 = scmp.ne.s32.totalorder %s31, %s32
    %p41 = scmp.eq.s32.totalorder %s14, 0
    %p42 = por %p40, %p41
    %p43 = scmp.ne.s32.totalorder %s31, %s32
    %p44 = scmp.eq.s32.totalorder %s15, 1
    %p45 = por %p43, %p44
    %p47 = scmp.ne.s32.totalorder %s32, %s46
    %p48 = scmp.eq.s32.totalorder %s15, 0
    %p49 = por %p47, %p48
    %s50 = ssub.s32 %s16, %s28
    %s51 = ssub.s32 %s17, %s24
    %s52 = sor.u32 %s50, %s51
    %p53 = scmp.eq.s32.totalorder %s52, 0
    %s55 = sadd.s32 %s54, 1
    %s56 = scalar_select %p53, %s54, %s55
    %p59 = pneg %p53
    %p60 = scmp.eq.s32.totalorder %s9, 1
    %p61 = por %p59, %p60
    %p62 = scmp.ne.s32.totalorder %s54, %s57
    %p63 = scmp.eq.s32.totalorder %s9, 0
    %p64 = por %p62, %p63
    %p65 = scmp.ne.s32.totalorder %s54, %s57
    %p66 = scmp.eq.s32.totalorder %s14, 1
    %p67 = por %p65, %p66
    %p68 = scmp.ne.s32.totalorder %s57, %s58
    %p69 = scmp.eq.s32.totalorder %s14, 0
    %p70 = por %p68, %p69
    %p71 = scmp.ne.s32.totalorder %s57, %s58
    %p72 = scmp.eq.s32.totalorder %s15, 1
    %p73 = por %p71, %p72
    %p75 = scmp.ne.s32.totalorder %s58, %s74
    %p76 = scmp.eq.s32.totalorder %s15, 0
    %p77 = por %p75, %p76
    %s79 = sadd.s32 %s78, 1
    %p82 = scmp.eq.s32.totalorder %s9, 1
    %p83 = scmp.ne.s32.totalorder %s78, %s80
    %p84 = scmp.eq.s32.totalorder %s9, 0
    %p85 = por %p83, %p84
    %p86 = scmp.ne.s32.totalorder %s78, %s80
    %p87 = scmp.eq.s32.totalorder %s14, 1
    %p88 = por %p86, %p87
    %p89 = scmp.ne.s32.totalorder %s80, %s81
    %p90 = scmp.eq.s32.totalorder %s14, 0
    %p91 = por %p89, %p90
    %p92 = scmp.ne.s32.totalorder %s80, %s81
    %p93 = scmp.eq.s32.totalorder %s15, 1
    %p94 = por %p92, %p93
    %p96 = scmp.ne.s32.totalorder %s81, %s95
    %p97 = scmp.eq.s32.totalorder %s15, 0
    %p98 = por %p96, %p97
    %s99 = ssub.s32 %s16, %s28
    %s100 = ssub.s32 %s17, %s24
    %s101 = sor.u32 %s99, %s100
    %p102 = scmp.eq.s32.totalorder %s101, 0
    %s104 = sadd.s32 %s103, 1
    %s105 = scalar_select %p102, %s103, %s104
    %p108 = pneg %p102
    %p109 = scmp.eq.s32.totalorder %s9, 1
    %p110 = por %p108, %p109
    %p111 = scmp.ne.s32.totalorder %s103, %s106
    %p112 = scmp.eq.s32.totalorder %s9, 0
    %p113 = por %p111, %p112
    %p114 = scmp.ne.s32.totalorder %s103, %s106
    %p115 = scmp.eq.s32.totalorder %s14, 1
    %p116 = por %p114, %p115
    %p117 = scmp.ne.s32.totalorder %s106, %s107
    %p118 = scmp.eq.s32.totalorder %s14, 0
    %p119 = por %p117, %p118
    %p120 = scmp.ne.s32.totalorder %s106, %s107
    %p121 = scmp.eq.s32.totalorder %s15, 1
    %p122 = por %p120, %p121
    %p124 = scmp.ne.s32.totalorder %s107, %s123
    %p125 = scmp.eq.s32.totalorder %s15, 0
    %p126 = por %p124, %p125
    %p127 = scmp.le.s32.totalorder 1, %s9
    %p128 = scmp.lt.s32.totalorder %s9, 3
    %p129 = pnand %p127, %p128
    %p130 = pneg %p129
    // Predicated region
    $region9: #{special_patch_embed_forward.2} parent=5 // pred_check
      _
    $region10: #{special_patch_embed_forward.2} parent=5 // pred_check_branch
      %132 = sbr.rel (%p129) target = $region12
    $region11: #{special_patch_embed_forward.2} parent=5 // pred_region
      %s133 = ssub.s32 %s9, 1
      // Predicated region
      $region13: #{special_patch_embed_forward.2} parent=11 // pred_check
        %p134 = pneg %p42
      $region14: #{special_patch_embed_forward.2} parent=11 // pred_check_branch
        %136 = sbr.rel (%p134) target = $region16
      $region15: #{special_patch_embed_forward.2} parent=11 // pred_region
        _
      $region16: #{special_patch_embed_forward.2} parent=11 // pred_fallthru
        _
      // Predicated region
      $region17: #{special_patch_embed_forward.2} parent=11 // pred_check
        %p137 = pneg %p91
      $region18: #{special_patch_embed_forward.2} parent=11 // pred_check_branch
        %139 = sbr.rel (%p137) target = $region20
      $region19: #{special_patch_embed_forward.2} parent=11 // pred_region
        _
      $region20: #{special_patch_embed_forward.2} parent=11 // pred_fallthru
        _
    $region12: #{special_patch_embed_forward.2} parent=5 // pred_fallthru
      _
    %p140 = scmp.lt.s32.totalorder %s9, 2
    // Predicated region
    $region21: #{special_patch_embed_forward.2} parent=5 // pred_check
      %p141 = pneg %p140
    $region22: #{special_patch_embed_forward.2} parent=5 // pred_check_branch
      %143 = sbr.rel (%p141) target = $region24
    $region23: #{special_patch_embed_forward.2} parent=5 // pred_region
      // Predicated region
      $region25: #{special_patch_embed_forward.2} parent=23 // pred_check
        %p144 = pneg %p64
      $region26: #{special_patch_embed_forward.2} parent=23 // pred_check_branch
        %146 = sbr.rel (%p144) target = $region28
      $region27: #{special_patch_embed_forward.2} parent=23 // pred_region
        %s147 = smul.u32 2, %s17
        %p148 = scmp.lt.s32.totalorder %s16, 1
        %s149 = scalar_select %p148, %s16, 1
        %p150 = scmp.lt.s32.totalorder %s147, 1
        %s151 = scalar_select %p150, %s147, 1
        %s152 = smul.addr %s149, 22
        %s153 = sadd.s32 %s151, %s152
        %s154 = smul.addr %s153, 4
        %s155 = scalar_lea.vmem %s1, %s154
        %s156 = smul.u32 2, %s17
      $region28: #{special_patch_embed_forward.2} parent=23 // pred_fallthru
        _
    $region24: #{special_patch_embed_forward.2} parent=5 // pred_fallthru
      _
    %p157 = scmp.le.s32.totalorder 1, %s9
    %p158 = scmp.lt.s32.totalorder %s9, 3
    %p159 = pnand %p157, %p158
    %p160 = pneg %p159
    // Predicated region
    $region29: #{special_patch_embed_forward.2} parent=5 // pred_check
      _
    $region30: #{special_patch_embed_forward.2} parent=5 // pred_check_branch
      %162 = sbr.rel (%p159) target = $region32
    $region31: #{special_patch_embed_forward.2} parent=5 // pred_region
      %s163 = ssub.s32 %s9, 1
      %p164 = pneg %p42
      %p165 = pneg %p39
      %s166 = smul.u32 2, %s19
      %p167 = scmp.lt.s32.totalorder %s18, 1
      %s168 = scalar_select %p167, %s18, 1
      %p169 = scmp.lt.s32.totalorder %s166, 1
      %s170 = scalar_select %p169, %s166, 1
      %s171 = smul.addr %s168, 22
      %s172 = sadd.s32 %s170, %s171
      %s173 = smul.addr %s172, 4
      %s174 = scalar_lea.vmem %s1, %s173
      %p175 = pneg %p70
      %p176 = pneg %p67
      %p177 = pneg %p91
      %p178 = pneg %p88
      %p179 = pneg %p119
      %p180 = pneg %p116
      %s181 = smul.u32 2, %s19
      %p182 = scmp.lt.s32.totalorder %s18, 1
      %s183 = scalar_select %p182, %s18, 1
      %p184 = scmp.lt.s32.totalorder %s181, 1
      %s185 = scalar_select %p184, %s181, 1
      %s186 = smul.addr %s183, 4
      %s187 = sadd.s32 %s185, %s186
      %s188 = smul.addr %s187, 4
      %s189 = scalar_lea.vmem %s3, %s188
      %s190 = smul.u32 2, %s19
      %p191 = scmp.lt.s32.totalorder %s18, 1
      %s192 = scalar_select %p191, %s18, 1
      %p193 = scmp.lt.s32.totalorder %s190, 1
      %s194 = scalar_select %p193, %s190, 1
      %s195 = smul.addr %s192, 22
      %s196 = sadd.s32 %s194, %s195
      %s197 = smul.addr %s196, 4
      %s198 = scalar_lea.vmem %s1, %s197
      %s199 = smul.u32 2, %s19
      %s200 = smul.u32 2, %s19
      %p201 = scmp.lt.s32.totalorder %s18, 1
      %s202 = scalar_select %p201, %s18, 1
      %p203 = scmp.lt.s32.totalorder %s200, 1
      %s204 = scalar_select %p203, %s200, 1
      %s205 = smul.addr %s202, 4
      %s206 = sadd.s32 %s204, %s205
      %s207 = smul.addr %s206, 4
      %s208 = scalar_lea.vmem %s3, %s207
      %s209 = smul.u32 2, %s19
      %v211 = vld [vmem:[%s0] sm:$0xf]
      %v212 = vld [vmem:[%s0 + $0x4] sm:$0xf]
      %v213 = vld [vmem:[%s198] sm:$0xff]
      %v214 = vld [vmem:[%s198 + $0x8] sm:$0xff]
      %v215 = vld [vmem:[%s198 + $0x10] sm:$0xff]
      %v216 = vld [vmem:[%s198 + $0x18] sm:$0xff]
      %v217 = vld [vmem:[%s198 + $0x20] sm:$0xff]
      %v218 = vld [vmem:[%s198 + $0x28] sm:$0xff]
      %v219 = vld [vmem:[%s198 + $0x30] sm:$0xff]
      %v220 = vld [vmem:[%s198 + $0x38] sm:$0xff]
      %v221 = vld [vmem:[%s198 + $0x40] sm:$0xff]
      %v222 = vld [vmem:[%s198 + $0x48] sm:$0xff]
      %v223 = vld [vmem:[%s198 + $0x50] sm:$0x11]
      %v224 = vld [vmem:[%s2] sm:$0xff]
      %v225 = vld [vmem:[%s2 + $0x8] sm:$0xff]
      %227 = vset.pattern.permute.xlu0 0
      %228 = vperm.xlu0 %227, %v224
      %v229 = vpop.permute.xlu0 %228
      %232 = vset.pattern.permute.xlu0 0
      %233 = vperm.xlu0 %232, %v225
      %v234 = vpop.permute.xlu0 %233
      %v238 = vunpack.c.l.b16 %v211
      %v239 = vunpack.c.l.b16 %v212
      %v240 = vpack.c.b16 %v239, %v238
      %v252 = vunpack.c.l.b16 %v213
      %v253 = vunpack.c.h.b16 %v213
      %v254 = vunpack.c.l.b16 %v214
      %v255 = vunpack.c.h.b16 %v214
      %v256 = vunpack.c.l.b16 %v215
      %v257 = vunpack.c.h.b16 %v215
      %v258 = vunpack.c.l.b16 %v216
      %v259 = vunpack.c.h.b16 %v216
      %v260 = vunpack.c.l.b16 %v217
      %v261 = vunpack.c.h.b16 %v217
      %v262 = vunpack.c.l.b16 %v218
      %v263 = vunpack.c.h.b16 %v218
      %v264 = vunpack.c.l.b16 %v219
      %v265 = vunpack.c.h.b16 %v219
      %v266 = vunpack.c.l.b16 %v220
      %v267 = vunpack.c.h.b16 %v220
      %v268 = vunpack.c.l.b16 %v221
      %v269 = vunpack.c.h.b16 %v221
      %v270 = vunpack.c.l.b16 %v222
      %v271 = vunpack.c.h.b16 %v222
      %v272 = vunpack.c.l.b16 %v223
      %v273 = vunpack.c.h.b16 %v223
      %v274 = vpack.c.b16 %v254, %v252
      %v275 = vpack.c.b16 %v255, %v253
      %v276 = vpack.c.b16 %v258, %v256
      %v277 = vpack.c.b16 %v259, %v257
      %v278 = vpack.c.b16 %v262, %v260
      %v279 = vpack.c.b16 %v263, %v261
      %v280 = vpack.c.b16 %v266, %v264
      %v281 = vpack.c.b16 %v267, %v265
      %v282 = vpack.c.b16 %v270, %v268
      %v283 = vpack.c.b16 %v271, %v269
      %v284 = vpack.c.b16 %v272, %v272
      %v285 = vpack.c.b16 %v273, %v273
      %vm296 = vcmask 662528
      %v298 = vsel %vm296, %v240, 0
      %vm300 = vcmask 1040384
      %v301 = vsel 0, 4294967295, 65535
      %v302 = vsel %vm300, %v301, 0
      %v304 = vand.u32 %v284, %v302
      %v307 = vand.u32 %v285, %v302
      %309 = vmatpush.bf16.msra.mxu0 0
      %310 = vmatpush.bf16.msra.mxu0 0
      %311 = vmatpush.bf16.msra.mxu0 %v304
      %312 = vmatpush.bf16.msra.mxu0 %v282
      %313 = vmatpush.bf16.msra.mxu0 %v280
      %314 = vmatpush.bf16.msra.mxu0 %v278
      %315 = vmatpush.bf16.msra.mxu0 %v276
      %316 = vmatpush.bf16.msra.mxu0 %v274
      %317 = vmatmul.bf16.gmra.mxu0 %v298
      %v318 = vpop.f32.mrf.mxu0
      %v319 = vadd.f32 %v229, %v318
      %v320 = vpop.f32.mrf.mxu0
      %v321 = vadd.f32 %v234, %v320
      %322 = vdwg.mxu0
      %323 = vmatpush.bf16.msra.mxu0 0
      %324 = vmatpush.bf16.msra.mxu0 0
      %325 = vmatpush.bf16.msra.mxu0 %v307
      %326 = vmatpush.bf16.msra.mxu0 %v283
      %327 = vmatpush.bf16.msra.mxu0 %v281
      %328 = vmatpush.bf16.msra.mxu0 %v279
      %329 = vmatpush.bf16.msra.mxu0 %v277
      %330 = vmatpush.bf16.msra.mxu0 %v275
      %331 = vmatmul.bf16.gmra.mxu0 %v298
      %v332 = vpop.f32.mrf.mxu0
      %v333 = vadd.f32 %v229, %v332
      %v334 = vpop.f32.mrf.mxu0
      %v335 = vadd.f32 %v234, %v334
      %336 = vdwg.mxu0
      %v337 = vmul.f32 %v319, 0.5
      %v338 = vmul.f32 %v333, 0.5
      %v339 = vmul.f32 %v321, 0.5
      %v340 = vmul.f32 %v335, 0.5
      %v341 = vmul.f32 %v319, %v319
      %v342 = vmul.f32 %v333, %v333
      %v343 = vmul.f32 %v321, %v321
      %v344 = vmul.f32 %v335, %v335
      %v345 = vmul.f32 %v341, %v319
      %v346 = vmul.f32 %v342, %v333
      %v347 = vmul.f32 %v343, %v321
      %v348 = vmul.f32 %v344, %v335
      %v349 = vmul.f32 %v345, 0.044715
      %v350 = vmul.f32 %v346, 0.044715
      %v351 = vmul.f32 %v347, 0.044715
      %v352 = vmul.f32 %v348, 0.044715
      %v353 = vadd.f32 %v319, %v349
      %v354 = vadd.f32 %v333, %v350
      %v355 = vadd.f32 %v321, %v351
      %v356 = vadd.f32 %v335, %v352
      %v357 = vmul.f32 %v353, 0.7978846
      %v358 = vmul.f32 %v354, 0.7978846
      %v359 = vmul.f32 %v355, 0.7978846
      %v360 = vmul.f32 %v356, 0.7978846
      %v361 = vtanh.pop %v357
      %v362 = vtanh.pop %v358
      %v363 = vtanh.pop %v359
      %v364 = vtanh.pop %v360
      %v365 = vadd.f32 %v361, 1.0
      %v366 = vadd.f32 %v362, 1.0
      %v367 = vadd.f32 %v363, 1.0
      %v368 = vadd.f32 %v364, 1.0
      %v369 = vmul.f32 %v337, %v365
      %v370 = vmul.f32 %v338, %v366
      %v371 = vmul.f32 %v339, %v367
      %v372 = vmul.f32 %v340, %v368
      %v373 = vpack.c.bf16 %v370, %v369
      %v374 = vpack.c.bf16 %v372, %v371
      %375 = vst [vmem:[%s208] sm:$0xff] %v373
      %376 = vst [vmem:[%s208 + $0x8] sm:$0xff] %v374
      %s377 = smul.u32 2, %s19
      %p378 = scmp.lt.s32.totalorder %s18, 1
      %s379 = scalar_select %p378, %s18, 1
      %p380 = scmp.lt.s32.totalorder %s377, 1
      %s381 = scalar_select %p380, %s377, 1
      %s382 = smul.addr %s379, 4
      %s383 = sadd.s32 %s381, %s382
      %s384 = smul.addr %s383, 4
      %s385 = scalar_lea.vmem %s3, %s384
      // Predicated region
      $region33: #{special_patch_embed_forward.2} parent=31 // pred_check
        %p386 = pneg %p116
      $region34: #{special_patch_embed_forward.2} parent=31 // pred_check_branch
        %388 = sbr.rel (%p386) target = $region36
      $region35: #{special_patch_embed_forward.2} parent=31 // pred_region
        %s389 = smul.u32 2, %s19
      $region36: #{special_patch_embed_forward.2} parent=31 // pred_fallthru
        _
    $region32: #{special_patch_embed_forward.2} parent=5 // pred_fallthru
      _
    %p390 = scmp.le.s32.totalorder 2, %s9
    // Predicated region
    $region37: #{special_patch_embed_forward.2} parent=5 // pred_check
      %p391 = pneg %p390
    $region38: #{special_patch_embed_forward.2} parent=5 // pred_check_branch
      %393 = sbr.rel (%p391) target = $region40
    $region39: #{special_patch_embed_forward.2} parent=5 // pred_region
      %s394 = ssub.s32 %s9, 2
      // Predicated region
      $region41: #{special_patch_embed_forward.2} parent=39 // pred_check
        %p395 = pneg %p122
      $region42: #{special_patch_embed_forward.2} parent=39 // pred_check_branch
        %397 = sbr.rel (%p395) target = $region44
      $region43: #{special_patch_embed_forward.2} parent=39 // pred_region
        %s398 = smul.u32 2, %s21
        %p399 = scmp.lt.s32.totalorder %s20, 1
        %s400 = scalar_select %p399, %s20, 1
        %p401 = scmp.lt.s32.totalorder %s398, 1
        %s402 = scalar_select %p401, %s398, 1
        %s403 = smul.addr %s400, 4
        %s404 = sadd.s32 %s402, %s403
        %s405 = smul.addr %s404, 4
        %s406 = scalar_lea.vmem %s3, %s405
      $region44: #{special_patch_embed_forward.2} parent=39 // pred_fallthru
        _
    $region40: #{special_patch_embed_forward.2} parent=5 // pred_fallthru
      _
  $region6: #{special_patch_embed_forward.2} parent=0 // loop_footer
    %s13 = sadd.s32 1, %s9
  $region7: #{special_patch_embed_forward.2} parent=0 // loop_footer_branch
    %8 = sbr.rel target = $region3
  $region8: #{special_patch_embed_forward.2} parent=0 // loop_exit
    _

// kernel: special_patch_embed_forward.3
$region0: #{special_patch_embed_forward.3}
  #allocation0 [shape = 'u32[]', space=smem, size = 0x4, offset = 0x4, fixed_abs, tag = 'smem constant byte address 0x4 - core index']
  #allocation1 [shape = 'u32[72,128]{1,0:T(1,128)}', space=vmem, size = 0x9000, scoped, tag = 'internal scratch']
  %s0 = inlined_call_operand.vmem [shape: bf16[32,432], index: 0, kind: input, shape index: {}]
  %s1 = inlined_call_operand.vmem [shape: bf16[2,432,32], index: 1, kind: input, shape index: {}]
  %s2 = inlined_call_operand.vmem [shape: f32[32,1], index: 2, kind: input, shape index: {}]
  %s3 = inlined_call_operand.vmem [shape: f32[2,32,32], index: 3, kind: output, shape index: {}]
  %s4 = sld [smem:[#allocation0]]
  $region45: #{special_patch_embed_forward.3} parent=0
    _
  %s6 = ssub.s32 1, %s4
  %s7 = scalar_select 0, %s6, %s4
  loop: start=0, step=1, limit=4
  $region2: #{special_patch_embed_forward.3} parent=0 // loop_pre_header
    _
  $region3: #{special_patch_embed_forward.3} parent=0 // loop_header
    %s9 = sphi 0, %s13
    %p10 = scmp.ge.s32.totalorder %s9, 4
    %s16 = sphi 0, %s28
    %s17 = sphi 0, %s24
    %s18 = sphi 0, %s16
    %s19 = sphi 0, %s17
    %s20 = sphi 0, %s18
    %s21 = sphi 0, %s19
    %s29 = sphi 0, %s29
    %s31 = sphi 0, %s29
    %s32 = sphi 0, %s31
    %s46 = sphi 0, %s32
    %s54 = sphi 0, %s56
    %s57 = sphi 0, %s54
    %s58 = sphi 0, %s57
    %s74 = sphi 0, %s58
    %s78 = sphi 0, %s78
    %s80 = sphi 0, %s78
    %s81 = sphi 0, %s80
    %s95 = sphi 0, %s81
    %s103 = sphi 0, %s105
    %s106 = sphi 0, %s103
    %s107 = sphi 0, %s106
    %s123 = sphi 0, %s107
  $region4: #{special_patch_embed_forward.3} parent=0 // loop_header_branch
    %12 = sbr.rel (%p10) target = $region8
  $region5: #{special_patch_embed_forward.3} parent=0 // loop_body
    %s14 = ssub.s32 %s9, 1
    %s15 = ssub.s32 %s9, 2
    %s22 = sadd.s32 1, %s17
    %p23 = scmp.ge.s32.totalorder %s22, 1
    %s24 = scalar_select %p23, 0, %s22
    %s25 = sadd.s32 1, %s16
    %s26 = scalar_select %p23, %s25, %s16
    %p27 = scmp.ge.s32.totalorder %s26, 2
    %s28 = scalar_select %p27, 0, %s26
    %s30 = sadd.s32 %s29, 1
    %p33 = scmp.eq.s32.totalorder %s9, 1
    %p34 = scmp.ne.s32.totalorder %s29, %s31
    %p35 = scmp.eq.s32.totalorder %s9, 0
    %p36 = por %p34, %p35
    %p37 = scmp.ne.s32.totalorder %s29, %s31
    %p38 = scmp.eq.s32.totalorder %s14, 1
    %p39 = por %p37, %p38
    %p40 = scmp.ne.s32.totalorder %s31, %s32
    %p41 = scmp.eq.s32.totalorder %s14, 0
    %p42 = por %p40, %p41
    %p43 = scmp.ne.s32.totalorder %s31, %s32
    %p44 = scmp.eq.s32.totalorder %s15, 1
    %p45 = por %p43, %p44
    %p47 = scmp.ne.s32.totalorder %s32, %s46
    %p48 = scmp.eq.s32.totalorder %s15, 0
    %p49 = por %p47, %p48
    %s50 = ssub.s32 %s16, %s28
    %s51 = ssub.s32 %s17, %s24
    %s52 = sor.u32 %s50, %s51
    %p53 = scmp.eq.s32.totalorder %s52, 0
    %s55 = sadd.s32 %s54, 1
    %s56 = scalar_select %p53, %s54, %s55
    %p59 = pneg %p53
    %p60 = scmp.eq.s32.totalorder %s9, 1
    %p61 = por %p59, %p60
    %p62 = scmp.ne.s32.totalorder %s54, %s57
    %p63 = scmp.eq.s32.totalorder %s9, 0
    %p64 = por %p62, %p63
    %p65 = scmp.ne.s32.totalorder %s54, %s57
    %p66 = scmp.eq.s32.totalorder %s14, 1
    %p67 = por %p65, %p66
    %p68 = scmp.ne.s32.totalorder %s57, %s58
    %p69 = scmp.eq.s32.totalorder %s14, 0
    %p70 = por %p68, %p69
    %p71 = scmp.ne.s32.totalorder %s57, %s58
    %p72 = scmp.eq.s32.totalorder %s15, 1
    %p73 = por %p71, %p72
    %p75 = scmp.ne.s32.totalorder %s58, %s74
    %p76 = scmp.eq.s32.totalorder %s15, 0
    %p77 = por %p75, %p76
    %s79 = sadd.s32 %s78, 1
    %p82 = scmp.eq.s32.totalorder %s9, 1
    %p83 = scmp.ne.s32.totalorder %s78, %s80
    %p84 = scmp.eq.s32.totalorder %s9, 0
    %p85 = por %p83, %p84
    %p86 = scmp.ne.s32.totalorder %s78, %s80
    %p87 = scmp.eq.s32.totalorder %s14, 1
    %p88 = por %p86, %p87
    %p89 = scmp.ne.s32.totalorder %s80, %s81
    %p90 = scmp.eq.s32.totalorder %s14, 0
    %p91 = por %p89, %p90
    %p92 = scmp.ne.s32.totalorder %s80, %s81
    %p93 = scmp.eq.s32.totalorder %s15, 1
    %p94 = por %p92, %p93
    %p96 = scmp.ne.s32.totalorder %s81, %s95
    %p97 = scmp.eq.s32.totalorder %s15, 0
    %p98 = por %p96, %p97
    %s99 = ssub.s32 %s16, %s28
    %s100 = ssub.s32 %s17, %s24
    %s101 = sor.u32 %s99, %s100
    %p102 = scmp.eq.s32.totalorder %s101, 0
    %s104 = sadd.s32 %s103, 1
    %s105 = scalar_select %p102, %s103, %s104
    %p108 = pneg %p102
    %p109 = scmp.eq.s32.totalorder %s9, 1
    %p110 = por %p108, %p109
    %p111 = scmp.ne.s32.totalorder %s103, %s106
    %p112 = scmp.eq.s32.totalorder %s9, 0
    %p113 = por %p111, %p112
    %p114 = scmp.ne.s32.totalorder %s103, %s106
    %p115 = scmp.eq.s32.totalorder %s14, 1
    %p116 = por %p114, %p115
    %p117 = scmp.ne.s32.totalorder %s106, %s107
    %p118 = scmp.eq.s32.totalorder %s14, 0
    %p119 = por %p117, %p118
    %p120 = scmp.ne.s32.totalorder %s106, %s107
    %p121 = scmp.eq.s32.totalorder %s15, 1
    %p122 = por %p120, %p121
    %p124 = scmp.ne.s32.totalorder %s107, %s123
    %p125 = scmp.eq.s32.totalorder %s15, 0
    %p126 = por %p124, %p125
    %p127 = scmp.le.s32.totalorder 1, %s9
    %p128 = scmp.lt.s32.totalorder %s9, 3
    %p129 = pnand %p127, %p128
    %p130 = pneg %p129
    // Predicated region
    $region9: #{special_patch_embed_forward.3} parent=5 // pred_check
      _
    $region10: #{special_patch_embed_forward.3} parent=5 // pred_check_branch
      %132 = sbr.rel (%p129) target = $region12
    $region11: #{special_patch_embed_forward.3} parent=5 // pred_region
      %s133 = ssub.s32 %s9, 1
      // Predicated region
      $region13: #{special_patch_embed_forward.3} parent=11 // pred_check
        %p134 = pneg %p42
      $region14: #{special_patch_embed_forward.3} parent=11 // pred_check_branch
        %136 = sbr.rel (%p134) target = $region16
      $region15: #{special_patch_embed_forward.3} parent=11 // pred_region
        _
      $region16: #{special_patch_embed_forward.3} parent=11 // pred_fallthru
        _
      // Predicated region
      $region17: #{special_patch_embed_forward.3} parent=11 // pred_check
        %p137 = pneg %p91
      $region18: #{special_patch_embed_forward.3} parent=11 // pred_check_branch
        %139 = sbr.rel (%p137) target = $region20
      $region19: #{special_patch_embed_forward.3} parent=11 // pred_region
        _
      $region20: #{special_patch_embed_forward.3} parent=11 // pred_fallthru
        _
    $region12: #{special_patch_embed_forward.3} parent=5 // pred_fallthru
      _
    %p140 = scmp.lt.s32.totalorder %s9, 2
    // Predicated region
    $region21: #{special_patch_embed_forward.3} parent=5 // pred_check
      %p141 = pneg %p140
    $region22: #{special_patch_embed_forward.3} parent=5 // pred_check_branch
      %143 = sbr.rel (%p141) target = $region24
    $region23: #{special_patch_embed_forward.3} parent=5 // pred_region
      // Predicated region
      $region25: #{special_patch_embed_forward.3} parent=23 // pred_check
        %p144 = pneg %p64
      $region26: #{special_patch_embed_forward.3} parent=23 // pred_check_branch
        %146 = sbr.rel (%p144) target = $region28
      $region27: #{special_patch_embed_forward.3} parent=23 // pred_region
        %p147 = scmp.lt.s32.totalorder %s16, 1
        %s148 = scalar_select %p147, %s16, 1
        %p149 = scmp.lt.s32.totalorder %s17, 0
        %s150 = scalar_select %p149, %s17, 0
        %s151 = smul.addr %s148, 54
        %s152 = sadd.s32 %s150, %s151
        %s153 = smul.addr %s152, 4
        %s154 = scalar_lea.vmem %s1, %s153
      $region28: #{special_patch_embed_forward.3} parent=23 // pred_fallthru
        _
    $region24: #{special_patch_embed_forward.3} parent=5 // pred_fallthru
      _
    %p155 = scmp.le.s32.totalorder 1, %s9
    %p156 = scmp.lt.s32.totalorder %s9, 3
    %p157 = pnand %p155, %p156
    %p158 = pneg %p157
    // Predicated region
    $region29: #{special_patch_embed_forward.3} parent=5 // pred_check
      _
    $region30: #{special_patch_embed_forward.3} parent=5 // pred_check_branch
      %160 = sbr.rel (%p157) target = $region32
    $region31: #{special_patch_embed_forward.3} parent=5 // pred_region
      %s161 = ssub.s32 %s9, 1
      %p162 = pneg %p42
      %p163 = pneg %p39
      %p164 = scmp.lt.s32.totalorder %s18, 1
      %s165 = scalar_select %p164, %s18, 1
      %p166 = scmp.lt.s32.totalorder %s19, 0
      %s167 = scalar_select %p166, %s19, 0
      %s168 = smul.addr %s165, 54
      %s169 = sadd.s32 %s167, %s168
      %s170 = smul.addr %s169, 4
      %s171 = scalar_lea.vmem %s1, %s170
      %p172 = pneg %p70
      %p173 = pneg %p67
      %p174 = pneg %p91
      %p175 = pneg %p88
      %p176 = pneg %p119
      %p177 = pneg %p116
      %p178 = scmp.lt.s32.totalorder %s18, 1
      %s179 = scalar_select %p178, %s18, 1
      %p180 = scmp.lt.s32.totalorder %s19, 0
      %s181 = scalar_select %p180, %s19, 0
      %s182 = smul.addr %s179, 4
      %s183 = sadd.s32 %s181, %s182
      %s184 = smul.addr %s183, 8
      %s185 = scalar_lea.vmem %s3, %s184
      %p186 = scmp.lt.s32.totalorder %s18, 1
      %s187 = scalar_select %p186, %s18, 1
      %p188 = scmp.lt.s32.totalorder %s19, 0
      %s189 = scalar_select %p188, %s19, 0
      %s190 = smul.addr %s187, 54
      %s191 = sadd.s32 %s189, %s190
      %s192 = smul.addr %s191, 4
      %s193 = scalar_lea.vmem %s1, %s192
      %p194 = scmp.lt.s32.totalorder %s18, 1
      %s195 = scalar_select %p194, %s18, 1
      %p196 = scmp.lt.s32.totalorder %s19, 0
      %s197 = scalar_select %p196, %s19, 0
      %s198 = smul.addr %s195, 4
      %s199 = sadd.s32 %s197, %s198
      %s200 = smul.addr %s199, 8
      %s201 = scalar_lea.vmem %s3, %s200
      %v203 = vld [vmem:[%s0] sm:$0xff]
      %v204 = vld [vmem:[%s0 + $0x8] sm:$0xff]
      %v205 = vld [vmem:[%s0 + $0x10] sm:$0xff]
      %v206 = vld [vmem:[%s0 + $0x18] sm:$0xff]
      %v207 = vld [vmem:[%s0 + $0x20] sm:$0xff]
      %v208 = vld [vmem:[%s0 + $0x28] sm:$0xff]
      %v209 = vld [vmem:[%s0 + $0x30] sm:$0xff]
      %v210 = vld [vmem:[%s0 + $0x38] sm:$0xff]
      %v211 = vld [vmem:[%s193] sm:$0xf]
      %v212 = vld [vmem:[%s193 + $0x4] sm:$0xf]
      %v213 = vld [vmem:[%s193 + $0x8] sm:$0xf]
      %v214 = vld [vmem:[%s193 + $0xc] sm:$0xf]
      %v215 = vld [vmem:[%s193 + $0x10] sm:$0xf]
      %v216 = vld [vmem:[%s193 + $0x14] sm:$0xf]
      %v217 = vld [vmem:[%s193 + $0x18] sm:$0xf]
      %v218 = vld [vmem:[%s193 + $0x1c] sm:$0xf]
      %v219 = vld [vmem:[%s193 + $0x20] sm:$0xf]
      %v220 = vld [vmem:[%s193 + $0x24] sm:$0xf]
      %v221 = vld [vmem:[%s193 + $0x28] sm:$0xf]
      %v222 = vld [vmem:[%s193 + $0x2c] sm:$0xf]
      %v223 = vld [vmem:[%s193 + $0x30] sm:$0xf]
      %v224 = vld [vmem:[%s193 + $0x34] sm:$0xf]
      %v225 = vld [vmem:[%s193 + $0x38] sm:$0xf]
      %v226 = vld [vmem:[%s193 + $0x3c] sm:$0xf]
      %v227 = vld [vmem:[%s193 + $0x40] sm:$0xf]
      %v228 = vld [vmem:[%s193 + $0x44] sm:$0xf]
      %v229 = vld [vmem:[%s193 + $0x48] sm:$0xf]
      %v230 = vld [vmem:[%s193 + $0x4c] sm:$0xf]
      %v231 = vld [vmem:[%s193 + $0x50] sm:$0xf]
      %v232 = vld [vmem:[%s193 + $0x54] sm:$0xf]
      %v233 = vld [vmem:[%s193 + $0x58] sm:$0xf]
      %v234 = vld [vmem:[%s193 + $0x5c] sm:$0xf]
      %v235 = vld [vmem:[%s193 + $0x60] sm:$0xf]
      %v236 = vld [vmem:[%s193 + $0x64] sm:$0xf]
      %v237 = vld [vmem:[%s193 + $0x68] sm:$0xf]
      %v238 = vld [vmem:[%s193 + $0x6c] sm:$0xf]
      %v239 = vld [vmem:[%s193 + $0x70] sm:$0xf]
      %v240 = vld [vmem:[%s193 + $0x74] sm:$0xf]
      %v241 = vld [vmem:[%s193 + $0x78] sm:$0xf]
      %v242 = vld [vmem:[%s193 + $0x7c] sm:$0xf]
      %v243 = vld [vmem:[%s193 + $0x80] sm:$0xf]
      %v244 = vld [vmem:[%s193 + $0x84] sm:$0xf]
      %v245 = vld [vmem:[%s193 + $0x88] sm:$0xf]
      %v246 = vld [vmem:[%s193 + $0x8c] sm:$0xf]
      %v247 = vld [vmem:[%s193 + $0x90] sm:$0xf]
      %v248 = vld [vmem:[%s193 + $0x94] sm:$0xf]
      %v249 = vld [vmem:[%s193 + $0x98] sm:$0xf]
      %v250 = vld [vmem:[%s193 + $0x9c] sm:$0xf]
      %v251 = vld [vmem:[%s193 + $0xa0] sm:$0xf]
      %v252 = vld [vmem:[%s193 + $0xa4] sm:$0xf]
      %v253 = vld [vmem:[%s193 + $0xa8] sm:$0xf]
      %v254 = vld [vmem:[%s193 + $0xac] sm:$0xf]
      %v255 = vld [vmem:[%s193 + $0xb0] sm:$0xf]
      %v256 = vld [vmem:[%s193 + $0xb4] sm:$0xf]
      %v257 = vld [vmem:[%s193 + $0xb8] sm:$0xf]
      %v258 = vld [vmem:[%s193 + $0xbc] sm:$0xf]
      %v259 = vld [vmem:[%s193 + $0xc0] sm:$0xf]
      %v260 = vld [vmem:[%s193 + $0xc4] sm:$0xf]
      %v261 = vld [vmem:[%s193 + $0xc8] sm:$0xf]
      %v262 = vld [vmem:[%s193 + $0xcc] sm:$0xf]
      %v263 = vld [vmem:[%s193 + $0xd0] sm:$0xf]
      %v264 = vld [vmem:[%s193 + $0xd4] sm:$0xf]
      %v265 = vld [vmem:[%s2] sm:$0xff]
      %v266 = vld [vmem:[%s2 + $0x8] sm:$0xff]
      %v267 = vld [vmem:[%s2 + $0x10] sm:$0xff]
      %v268 = vld [vmem:[%s2 + $0x18] sm:$0xff]
      %270 = vset.pattern.permute.xlu0 0
      %271 = vperm.xlu0 %270, %v265
      %v272 = vpop.permute.xlu0 %271
      %275 = vset.pattern.permute.xlu0 0
      %276 = vperm.xlu0 %275, %v266
      %v277 = vpop.permute.xlu0 %276
      %280 = vset.pattern.permute.xlu0 0
      %281 = vperm.xlu0 %280, %v267
      %v282 = vpop.permute.xlu0 %281
      %285 = vset.pattern.permute.xlu0 0
      %286 = vperm.xlu0 %285, %v268
      %v287 = vpop.permute.xlu0 %286
      %v297 = vunpack.c.l.b16 %v203
      %v298 = vunpack.c.h.b16 %v203
      %v299 = vunpack.c.l.b16 %v204
      %v300 = vunpack.c.h.b16 %v204
      %v301 = vunpack.c.l.b16 %v205
      %v302 = vunpack.c.h.b16 %v205
      %v303 = vunpack.c.l.b16 %v206
      %v304 = vunpack.c.h.b16 %v206
      %v305 = vunpack.c.l.b16 %v207
      %v306 = vunpack.c.h.b16 %v207
      %v307 = vunpack.c.l.b16 %v208
      %v308 = vunpack.c.h.b16 %v208
      %v309 = vunpack.c.l.b16 %v209
      %v310 = vunpack.c.h.b16 %v209
      %v311 = vunpack.c.l.b16 %v210
      %v312 = vunpack.c.h.b16 %v210
      %v313 = vpack.c.b16 %v301, %v297
      %v314 = vpack.c.b16 %v302, %v298
      %v315 = vpack.c.b16 %v303, %v299
      %v316 = vpack.c.b16 %v304, %v300
      %v317 = vpack.c.b16 %v309, %v305
      %v318 = vpack.c.b16 %v310, %v306
      %v319 = vpack.c.b16 %v311, %v307
      %v320 = vpack.c.b16 %v312, %v308
      %v381 = vunpack.c.l.b16 %v211
      %v382 = vunpack.c.l.b16 %v212
      %v383 = vunpack.c.l.b16 %v213
      %v384 = vunpack.c.l.b16 %v214
      %v385 = vunpack.c.l.b16 %v215
      %v386 = vunpack.c.l.b16 %v216
      %v387 = vunpack.c.l.b16 %v217
      %v388 = vunpack.c.l.b16 %v218
      %v389 = vunpack.c.l.b16 %v219
      %v390 = vunpack.c.l.b16 %v220
      %v391 = vunpack.c.l.b16 %v221
      %v392 = vunpack.c.l.b16 %v222
      %v393 = vunpack.c.l.b16 %v223
      %v394 = vunpack.c.l.b16 %v224
      %v395 = vunpack.c.l.b16 %v225
      %v396 = vunpack.c.l.b16 %v226
      %v397 = vunpack.c.l.b16 %v227
      %v398 = vunpack.c.l.b16 %v228
      %v399 = vunpack.c.l.b16 %v229
      %v400 = vunpack.c.l.b16 %v230
      %v401 = vunpack.c.l.b16 %v231
      %v402 = vunpack.c.l.b16 %v232
      %v403 = vunpack.c.l.b16 %v233
      %v404 = vunpack.c.l.b16 %v234
      %v405 = vunpack.c.l.b16 %v235
      %v406 = vunpack.c.l.b16 %v236
      %v407 = vunpack.c.l.b16 %v237
      %v408 = vunpack.c.l.b16 %v238
      %v409 = vunpack.c.l.b16 %v239
      %v410 = vunpack.c.l.b16 %v240
      %v411 = vunpack.c.l.b16 %v241
      %v412 = vunpack.c.l.b16 %v242
      %v413 = vunpack.c.l.b16 %v243
      %v414 = vunpack.c.l.b16 %v244
      %v415 = vunpack.c.l.b16 %v245
      %v416 = vunpack.c.l.b16 %v246
      %v417 = vunpack.c.l.b16 %v247
      %v418 = vunpack.c.l.b16 %v248
      %v419 = vunpack.c.l.b16 %v249
      %v420 = vunpack.c.l.b16 %v250
      %v421 = vunpack.c.l.b16 %v251
      %v422 = vunpack.c.l.b16 %v252
      %v423 = vunpack.c.l.b16 %v253
      %v424 = vunpack.c.l.b16 %v254
      %v425 = vunpack.c.l.b16 %v255
      %v426 = vunpack.c.l.b16 %v256
      %v427 = vunpack.c.l.b16 %v257
      %v428 = vunpack.c.l.b16 %v258
      %v429 = vunpack.c.l.b16 %v259
      %v430 = vunpack.c.l.b16 %v260
      %v431 = vunpack.c.l.b16 %v261
      %v432 = vunpack.c.l.b16 %v262
      %v433 = vunpack.c.l.b16 %v263
      %v434 = vunpack.c.l.b16 %v264
      %v435 = vpack.c.b16 %v382, %v381
      %v436 = vpack.c.b16 %v384, %v383
      %v437 = vpack.c.b16 %v386, %v385
      %v438 = vpack.c.b16 %v388, %v387
      %v439 = vpack.c.b16 %v390, %v389
      %v440 = vpack.c.b16 %v392, %v391
      %v441 = vpack.c.b16 %v394, %v393
      %v442 = vpack.c.b16 %v396, %v395
      %v443 = vpack.c.b16 %v398, %v397
      %v444 = vpack.c.b16 %v400, %v399
      %v445 = vpack.c.b16 %v402, %v401
      %v446 = vpack.c.b16 %v404, %v403
      %v447 = vpack.c.b16 %v406, %v405
      %v448 = vpack.c.b16 %v408, %v407
      %v449 = vpack.c.b16 %v410, %v409
      %v450 = vpack.c.b16 %v412, %v411
      %v451 = vpack.c.b16 %v414, %v413
      %v452 = vpack.c.b16 %v416, %v415
      %v453 = vpack.c.b16 %v418, %v417
      %v454 = vpack.c.b16 %v420, %v419
      %v455 = vpack.c.b16 %v422, %v421
      %v456 = vpack.c.b16 %v424, %v423
      %v457 = vpack.c.b16 %v426, %v425
      %v458 = vpack.c.b16 %v428, %v427
      %v459 = vpack.c.b16 %v430, %v429
      %v460 = vpack.c.b16 %v432, %v431
      %v461 = vpack.c.b16 %v434, %v433
      %vm489 = vcmask 392192
      %v491 = vsel %vm489, %v316, 0
      %v494 = vsel %vm489, %v320, 0
      %496 = vmatpush.bf16.msra.mxu0 %v442
      %497 = vmatpush.bf16.msra.mxu0 %v441
      %498 = vmatpush.bf16.msra.mxu0 %v440
      %499 = vmatpush.bf16.msra.mxu0 %v439
      %500 = vmatpush.bf16.msra.mxu0 %v438
      %501 = vmatpush.bf16.msra.mxu0 %v437
      %502 = vmatpush.bf16.msra.mxu0 %v436
      %503 = vmatpush.bf16.msra.mxu0 %v435
      %504 = vmatmul.bf16.gmra.mxu0 %v313
      %v505 = vpop.f32.mrf.mxu0
      %v506 = vadd.f32 %v272, %v505
      %v507 = vpop.f32.mrf.mxu0
      %v508 = vadd.f32 %v277, %v507
      %509 = vmatmul.bf16.gmra.mxu0 %v317
      %v510 = vpop.f32.mrf.mxu0
      %v511 = vadd.f32 %v282, %v510
      %v512 = vpop.f32.mrf.mxu0
      %v513 = vadd.f32 %v287, %v512
      %514 = vdwg.mxu0
      %515 = vmatpush.bf16.msra.mxu0 %v450
      %516 = vmatpush.bf16.msra.mxu0 %v449
      %517 = vmatpush.bf16.msra.mxu0 %v448
      %518 = vmatpush.bf16.msra.mxu0 %v447
      %519 = vmatpush.bf16.msra.mxu0 %v446
      %520 = vmatpush.bf16.msra.mxu0 %v445
      %521 = vmatpush.bf16.msra.mxu0 %v444
      %522 = vmatpush.bf16.msra.mxu0 %v443
      %523 = vmatmul.bf16.gmra.mxu0 %v314
      %v524 = vpop.f32.mrf.mxu0
      %v525 = vadd.f32 %v506, %v524
      %v526 = vpop.f32.mrf.mxu0
      %v527 = vadd.f32 %v508, %v526
      %528 = vmatmul.bf16.gmra.mxu0 %v318
      %v529 = vpop.f32.mrf.mxu0
      %v530 = vadd.f32 %v511, %v529
      %v531 = vpop.f32.mrf.mxu0
      %v532 = vadd.f32 %v513, %v531
      %533 = vdwg.mxu0
      %534 = vmatpush.bf16.msra.mxu0 %v458
      %535 = vmatpush.bf16.msra.mxu0 %v457
      %536 = vmatpush.bf16.msra.mxu0 %v456
      %537 = vmatpush.bf16.msra.mxu0 %v455
      %538 = vmatpush.bf16.msra.mxu0 %v454
      %539 = vmatpush.bf16.msra.mxu0 %v453
      %540 = vmatpush.bf16.msra.mxu0 %v452
      %541 = vmatpush.bf16.msra.mxu0 %v451
      %542 = vmatmul.bf16.gmra.mxu0 %v315
      %v543 = vpop.f32.mrf.mxu0
      %v544 = vadd.f32 %v525, %v543
      %v545 = vpop.f32.mrf.mxu0
      %v546 = vadd.f32 %v527, %v545
      %547 = vmatmul.bf16.gmra.mxu0 %v319
      %v548 = vpop.f32.mrf.mxu0
      %v549 = vadd.f32 %v530, %v548
      %v550 = vpop.f32.mrf.mxu0
      %v551 = vadd.f32 %v532, %v550
      %552 = vdwg.mxu0
      %553 = vmatpush.bf16.msra.mxu0 0
      %554 = vmatpush.bf16.msra.mxu0 0
      %555 = vmatpush.bf16.msra.mxu0 0
      %556 = vmatpush.bf16.msra.mxu0 0
      %557 = vmatpush.bf16.msra.mxu0 0
      %558 = vmatpush.bf16.msra.mxu0 %v461
      %559 = vmatpush.bf16.msra.mxu0 %v460
      %560 = vmatpush.bf16.msra.mxu0 %v459
      %561 = vmatmul.bf16.gmra.mxu0 %v491
      %v562 = vpop.f32.mrf.mxu0
      %v563 = vadd.f32 %v544, %v562
      %v564 = vpop.f32.mrf.mxu0
      %v565 = vadd.f32 %v546, %v564
      %566 = vmatmul.bf16.gmra.mxu0 %v494
      %v567 = vpop.f32.mrf.mxu0
      %v568 = vadd.f32 %v549, %v567
      %v569 = vpop.f32.mrf.mxu0
      %v570 = vadd.f32 %v551, %v569
      %571 = vdwg.mxu0
      %vm572 = vcmask 261120
      %573 = vst.msk [vmem:[%s201] sm:$0xff] %vm572, %v563
      %574 = vst.msk [vmem:[%s201 + $0x8] sm:$0xff] %vm572, %v565
      %575 = vst.msk [vmem:[%s201 + $0x10] sm:$0xff] %vm572, %v568
      %576 = vst.msk [vmem:[%s201 + $0x18] sm:$0xff] %vm572, %v570
      %p577 = scmp.lt.s32.totalorder %s18, 1
      %s578 = scalar_select %p577, %s18, 1
      %p579 = scmp.lt.s32.totalorder %s19, 0
      %s580 = scalar_select %p579, %s19, 0
      %s581 = smul.addr %s578, 4
      %s582 = sadd.s32 %s580, %s581
      %s583 = smul.addr %s582, 8
      %s584 = scalar_lea.vmem %s3, %s583
      // Predicated region
      $region33: #{special_patch_embed_forward.3} parent=31 // pred_check
        %p585 = pneg %p116
      $region34: #{special_patch_embed_forward.3} parent=31 // pred_check_branch
        %587 = sbr.rel (%p585) target = $region36
      $region35: #{special_patch_embed_forward.3} parent=31 // pred_region
        _
      $region36: #{special_patch_embed_forward.3} parent=31 // pred_fallthru
        _
    $region32: #{special_patch_embed_forward.3} parent=5 // pred_fallthru
      _
    %p588 = scmp.le.s32.totalorder 2, %s9
    // Predicated region
    $region37: #{special_patch_embed_forward.3} parent=5 // pred_check
      %p589 = pneg %p588
    $region38: #{special_patch_embed_forward.3} parent=5 // pred_check_branch
      %591 = sbr.rel (%p589) target = $region40
    $region39: #{special_patch_embed_forward.3} parent=5 // pred_region
      %s592 = ssub.s32 %s9, 2
      // Predicated region
      $region41: #{special_patch_embed_forward.3} parent=39 // pred_check
        %p593 = pneg %p122
      $region42: #{special_patch_embed_forward.3} parent=39 // pred_check_branch
        %595 = sbr.rel (%p593) target = $region44
      $region43: #{special_patch_embed_forward.3} parent=39 // pred_region
        %p596 = scmp.lt.s32.totalorder %s20, 1
        %s597 = scalar_select %p596, %s20, 1
        %p598 = scmp.lt.s32.totalorder %s21, 0
        %s599 = scalar_select %p598, %s21, 0
        %s600 = smul.addr %s597, 4
        %s601 = sadd.s32 %s599, %s600
        %s602 = smul.addr %s601, 8
        %s603 = scalar_lea.vmem %s3, %s602
      $region44: #{special_patch_embed_forward.3} parent=39 // pred_fallthru
        _
    $region40: #{special_patch_embed_forward.3} parent=5 // pred_fallthru
      _
  $region6: #{special_patch_embed_forward.3} parent=0 // loop_footer
    %s13 = sadd.s32 1, %s9
  $region7: #{special_patch_embed_forward.3} parent=0 // loop_footer_branch
    %8 = sbr.rel target = $region3
  $region8: #{special_patch_embed_forward.3} parent=0 // loop_exit
    _

</llo_original>
